<compile_context>
chip_gen: v6e
topology: v6e:2x2x1
jax: 0.10.0
libtpu: 0.0.40
codegen_flags: <defaults>
</compile_context>

<pallas_src>
import functools

import jax
import jax.numpy as jnp
from jax.experimental import pallas as pl
from jax.experimental.pallas import tpu as pltpu


# ---------------------------------------------------------------------------
# Fused MBConv kernel (one grid step = one image, NCHW-flattened layout)
# ---------------------------------------------------------------------------

def _mbconv_fused_kernel(x_ref, wmm_ref, pch_ref, o_ref, *,
                         H, W, k, S, do_expand, add_residual):
    # x_ref:   (1, Cin, HW)        input (channels on sublanes, HW on lanes); residual source
    # wmm_ref: (Cmid+Cout, Cmid)   rows [0:Cmid, 0:Cin]   = expand weight (Cmid, Cin)
    #                              rows [Cmid:Cmid+Cout, 0:Cmid] = project weight (Cout, Cmid)
    # pch_ref: (Cmid+1, ncols)     per-channel slab:
    #             cols 0..k*k-1 : depthwise taps, col = ki*k+kj
    #             ndw+0/1       : bn0 scale / bias
    #             ndw+2/3       : bn1 scale / bias
    #             ndw+4/5       : bn2 scale / bias (rows 0..Cout-1)
    #             ndw+6         : SE expand bias (b_see)
    #             ndw+7..+S-1   : SE reduce weight (Cmid, S)
    #             ndw+7+S..     : SE expand weight transposed (Cmid, S)
    #             row Cmid, cols ndw+7..+S-1 : SE reduce bias (b_ser)
    # o_ref:   (1, Cout, HW)
    Cin = x_ref.shape[1]
    Cout = o_ref.shape[1]
    Cmid = pch_ref.shape[0] - 1
    HW = H * W
    ndw = k * k
    pad = (k - 1) // 2

    pch = pch_ref[...]                                    # tiny param slab, loaded once
    wmm = wmm_ref[...]
    x = x_ref[0].astype(jnp.float32)                      # (Cin, HW)

    # ---- stage 1: expand 1x1 conv (MXU) + BN0 + swish
    if do_expand:
        w_exp = wmm[0:Cmid, 0:Cin]                        # (Cmid, Cin)
        y = jnp.dot(w_exp, x, preferred_element_type=jnp.float32)   # (Cmid, HW)
        y = y * pch[0:Cmid, ndw:ndw + 1] + pch[0:Cmid, ndw + 1:ndw + 2]
        y = y * jax.nn.sigmoid(y)                         # swish
    else:
        y = x                                             # Cmid == Cin in this case

    # ---- stage 2: depthwise kxk conv + BN1 + swish (flattened HW, lane-shift taps)
    # H "same" padding = zero lane blocks around y; W boundary handled by lane masks.
    zpad = jnp.zeros((Cmid, 2 * pad * W), jnp.float32)
    yp = jnp.concatenate([zpad, y, zpad], axis=1)         # (Cmid, HW + 4*pad*W)
    base = 2 * pad * W

    col = jax.lax.broadcasted_iota(jnp.int32, (1, HW), 1)
    if W & (W - 1) == 0:
        w_pos = jnp.bitwise_and(col, W - 1)               # output column index (w coordinate)
    else:
        w_pos = col % W

    acc = jnp.zeros((Cmid, HW), jnp.float32)
    for kj in range(k):
        part = jnp.zeros((Cmid, HW), jnp.float32)
        for ki in range(k):
            d = (ki - pad) * W + (kj - pad)
            tap = yp[:, base + d:base + d + HW]           # (Cmid, HW) lane-offset slice (XLU)
            part = part + tap * pch[0:Cmid, ki * k + kj:ki * k + kj + 1]
        if kj < pad:                                      # reading w + (kj-pad) < 0 at left edge
            part = jnp.where(w_pos >= (pad - kj), part, 0.0)
        elif kj > pad:                                    # reading past right edge
            part = jnp.where(w_pos < W - (kj - pad), part, 0.0)
        acc = acc + part
    y = acc * pch[0:Cmid, ndw + 2:ndw + 3] + pch[0:Cmid, ndw + 3:ndw + 4]
    y = y * jax.nn.sigmoid(y)                             # (Cmid, HW)

    # ---- stage 3: squeeze-excite (VPU + cross-lane/sublane reductions; gate on (Cmid,1))
    c_ser = ndw + 7
    c_see = ndw + 7 + S
    pooled = jnp.sum(y, axis=1, keepdims=True) * (1.0 / HW)            # (Cmid, 1)
    wser = pch[0:Cmid, c_ser:c_ser + S]                                 # (Cmid, S)
    s_row = jnp.sum(pooled * wser, axis=0, keepdims=True)               # (1, S)
    s_row = s_row + pch[Cmid:Cmid + 1, c_ser:c_ser + S]                 # + b_ser
    s_row = s_row * jax.nn.sigmoid(s_row)                               # swish
    wsee = pch[0:Cmid, c_see:c_see + S]                                 # (Cmid, S)
    e = jnp.sum(wsee * s_row, axis=1, keepdims=True) + pch[0:Cmid, ndw + 6:ndw + 7]
    y = y * jax.nn.sigmoid(e)                                           # gate * x

    # ---- stage 4: project 1x1 conv (MXU) + BN2 (+ identity skip)
    w_proj = wmm[Cmid:Cmid + Cout, 0:Cmid]                               # (Cout, Cmid)
    z = jnp.dot(w_proj, y, preferred_element_type=jnp.float32)           # (Cout, HW)
    z = z * pch[0:Cout, ndw + 4:ndw + 5] + pch[0:Cout, ndw + 5:ndw + 6]
    if add_residual:
        z = z + x                                                        # Cin == Cout, stride == 1
    o_ref[0] = z.astype(o_ref.dtype)                                     # lane-dense store (HW=256)


# ---------------------------------------------------------------------------
# Parameter packing (tiny, done at trace time)
# ---------------------------------------------------------------------------

def _pack_params(P, *, Cin, Cmid, Cout, k, S, do_expand):
    ndw = k * k
    ncol = ndw + 7 + 2 * S
    pch = jnp.zeros((Cmid + 1, ncol), jnp.float32)
    pch = pch.at[:Cmid, 0:ndw].set(P["w_dw"].reshape(ndw, Cmid).T)
    if do_expand:
        pch = pch.at[:Cmid, ndw].set(P["bn0_s"])
        pch = pch.at[:Cmid, ndw + 1].set(P["bn0_b"])
    pch = pch.at[:Cmid, ndw + 2].set(P["bn1_s"])
    pch = pch.at[:Cmid, ndw + 3].set(P["bn1_b"])
    pch = pch.at[:Cout, ndw + 4].set(P["bn2_s"])
    pch = pch.at[:Cout, ndw + 5].set(P["bn2_b"])
    pch = pch.at[:Cmid, ndw + 6].set(P["b_see"])
    pch = pch.at[:Cmid, ndw + 7:ndw + 7 + S].set(P["w_ser"])
    pch = pch.at[:Cmid, ndw + 7 + S:ndw + 7 + 2 * S].set(P["w_see"].T)
    pch = pch.at[Cmid, ndw + 7:ndw + 7 + S].set(P["b_ser"])

    wmm = jnp.zeros((Cmid + Cout, Cmid), jnp.float32)
    if do_expand:
        wmm = wmm.at[:Cmid, :Cin].set(P["w_exp"].T)       # (Cmid, Cin)
    wmm = wmm.at[Cmid:Cmid + Cout, :Cmid].set(P["w_proj"].T)   # (Cout, Cmid)
    return wmm, pch


# ---------------------------------------------------------------------------
# MBConvBlock forward (NCHW in / NCHW out, like the PyTorch module)
# ---------------------------------------------------------------------------

def mbconv_forward(x_nchw, P, *, k=3, stride=1, expand_ratio=6, id_skip=True):
    assert stride == 1, "only the stride=1 configuration is implemented"
    B, Cin, H, W = x_nchw.shape
    HW = H * W
    Cmid = P["w_dw"].shape[-1]
    Cout = P["w_proj"].shape[1]
    S = P["w_ser"].shape[1]
    do_expand = expand_ratio != 1
    if not do_expand:
        assert Cmid == Cin, "expand_ratio==1 requires Cmid == Cin"
    add_residual = bool(id_skip and stride == 1 and Cin == Cout)

    x = x_nchw.reshape(B, Cin, HW).astype(jnp.float32)        # metadata-only reshape (NCHW flat)
    wmm, pch = _pack_params(P, Cin=Cin, Cmid=Cmid, Cout=Cout, k=k, S=S, do_expand=do_expand)

    kernel = functools.partial(_mbconv_fused_kernel, H=H, W=W, k=k, S=S,
                               do_expand=do_expand, add_residual=add_residual)

    out = pl.pallas_call(
        kernel,
        out_shape=jax.ShapeDtypeStruct((B, Cout, HW), jnp.float32),
        grid=(B,),
        in_specs=[
            pl.BlockSpec((1, Cin, HW), lambda b: (b, 0, 0)),
            pl.BlockSpec(wmm.shape, lambda b: (0, 0)),
            pl.BlockSpec(pch.shape, lambda b: (0, 0)),
        ],
        out_specs=pl.BlockSpec((1, Cout, HW), lambda b: (b, 0, 0)),
        compiler_params=pltpu.CompilerParams(dimension_semantics=("parallel",)),
    )(x, wmm, pch)

    return out.reshape(B, Cout, H, W)                          # metadata-only reshape back


# ---------------------------------------------------------------------------
# Deterministic parameter init (shapes follow the module __init__, BN folded)
# ---------------------------------------------------------------------------

def _bn_fold(key, c, eps):
    k1, k2, k3, k4 = jax.random.split(key, 4)
    gamma = 1.0 + 0.1 * jax.random.normal(k1, (c,), jnp.float32)
    beta = 0.1 * jax.random.normal(k2, (c,), jnp.float32)
    mean = 0.1 * jax.random.normal(k3, (c,), jnp.float32)
    var = 1.0 + 0.1 * jax.random.uniform(k4, (c,), jnp.float32)
    scale = gamma / jnp.sqrt(var + eps)
    return scale, beta - mean * scale


def init_params(cin=4, expand_ratio=6, k=3, se_ratio=0.25, cout=4, eps=1e-3, seed=1):
    cmid = cin * expand_ratio
    s = max(1, int(cin * se_ratio))
    keys = jax.random.split(jax.random.PRNGKey(seed), 10)
    P = {}
    # expand conv: torch weight (cmid, cin, 1, 1) -> (cin, cmid) matmul layout
    P["w_exp"] = 0.3 * jax.random.normal(keys[0], (cin, cmid), jnp.float32)
    P["bn0_s"], P["bn0_b"] = _bn_fold(keys[1], cmid, eps)
    # depthwise conv: torch weight (cmid, 1, k, k) -> (k, k, cmid)
    P["w_dw"] = 0.3 * jax.random.normal(keys[2], (k, k, cmid), jnp.float32)
    P["bn1_s"], P["bn1_b"] = _bn_fold(keys[3], cmid, eps)
    # SE: reduce (s, cmid, 1, 1)+bias(s) -> (cmid, s); expand (cmid, s, 1, 1)+bias(cmid) -> (s, cmid)
    P["w_ser"] = 0.3 * jax.random.normal(keys[4], (cmid, s), jnp.float32)
    P["b_ser"] = 0.1 * jax.random.normal(keys[5], (s,), jnp.float32)
    P["w_see"] = 0.3 * jax.random.normal(keys[6], (s, cmid), jnp.float32)
    P["b_see"] = 0.1 * jax.random.normal(keys[7], (cmid,), jnp.float32)
    # project conv: torch weight (cout, cmid, 1, 1) -> (cmid, cout)
    P["w_proj"] = 0.3 * jax.random.normal(keys[8], (cmid, cout), jnp.float32)
    P["bn2_s"], P["bn2_b"] = _bn_fold(keys[9], cout, eps)
    return P


# ---------------------------------------------------------------------------
# Pure-JAX reference (mirrors the PyTorch forward math) for validation
# ---------------------------------------------------------------------------

def reference_forward(x_nchw, P, k=3):
    x = jnp.transpose(x_nchw, (0, 2, 3, 1)).astype(jnp.float32)
    inputs = x
    B, H, W, _ = x.shape
    y = jnp.einsum("bhwc,cd->bhwd", x, P["w_exp"])
    y = y * P["bn0_s"] + P["bn0_b"]
    y = y * jax.nn.sigmoid(y)
    pad_lo = (k - 1) // 2
    yp = jnp.pad(y, ((0, 0), (pad_lo, k - 1 - pad_lo), (pad_lo, k - 1 - pad_lo), (0, 0)))
    acc = jnp.zeros_like(y)
    for ki in range(k):
        for kj in range(k):
            acc = acc + yp[:, ki:ki + H, kj:kj + W, :] * P["w_dw"][ki, kj]
    y = acc * P["bn1_s"] + P["bn1_b"]
    y = y * jax.nn.sigmoid(y)
    pooled = jnp.mean(y, axis=(1, 2))
    s = pooled @ P["w_ser"] + P["b_ser"]
    s = s * jax.nn.sigmoid(s)
    e = s @ P["w_see"] + P["b_see"]
    y = y * jax.nn.sigmoid(e)[:, None, None, :]
    z = jnp.einsum("bhwc,cd->bhwd", y, P["w_proj"])
    z = z * P["bn2_s"] + P["bn2_b"]
    z = z + inputs
    return jnp.transpose(z, (0, 3, 1, 2))


if __name__ == "__main__":
    x = jax.random.normal(jax.random.PRNGKey(0), (2, 4, 16, 16), jnp.float32)  # NCHW
    P = init_params(cin=4, expand_ratio=6, k=3, se_ratio=0.25, cout=4)

    out = mbconv_forward(x, P, k=3, stride=1, expand_ratio=6, id_skip=True)
    out = jax.block_until_ready(out)

    ref = reference_forward(x, P, k=3)
    assert out.shape == (2, 4, 16, 16)
    assert jnp.allclose(out, ref, atol=1e-2, rtol=1e-2), "mismatch vs reference"
    print("KERNEL_OK")
</pallas_src>

<mosaic_0001>
module attributes {stable_mosaic.version = 11 : i64} {
  func.func @_mbconv_fused_kernel(%arg0: i32, %arg1: memref<1x4x256xf32, #tpu.memory_space<vmem>>, %arg2: memref<28x24xf32, #tpu.memory_space<vmem>>, %arg3: memref<25x18xf32, #tpu.memory_space<vmem>>, %arg4: memref<1x4x256xf32, #tpu.memory_space<vmem>>) attributes {dimension_semantics = [#tpu.dimension_semantics<parallel>], iteration_bounds = array<i64: 2>, scalar_prefetch = 0 : i64, scratch_operands = 0 : i64, tpu.core_type = #tpu.core_type<tc>, window_params = [{transform_indices = @transform_0, window_bounds = array<i64: 1, 4, 256>}, {pipeline_mode = #tpu.pipeline_mode<synchronous>, transform_indices = @transform_1, window_bounds = array<i64: 28, 24>}, {pipeline_mode = #tpu.pipeline_mode<synchronous>, transform_indices = @transform_2, window_bounds = array<i64: 25, 18>}, {transform_indices = @transform_3, window_bounds = array<i64: 1, 4, 256>}]} {
    %c0 = arith.constant 0 : index
    %c0_0 = arith.constant 0 : index
    %0 = vector.load %arg3[%c0, %c0_0] : memref<25x18xf32, #tpu.memory_space<vmem>>, vector<25x18xf32>
    %c0_1 = arith.constant 0 : index
    %c0_2 = arith.constant 0 : index
    %1 = vector.load %arg2[%c0_1, %c0_2] : memref<28x24xf32, #tpu.memory_space<vmem>>, vector<28x24xf32>
    %c0_3 = arith.constant 0 : index
    %c0_4 = arith.constant 0 : index
    %c0_5 = arith.constant 0 : index
    %2 = vector.load %arg1[%c0_3, %c0_4, %c0_5] : memref<1x4x256xf32, #tpu.memory_space<vmem>>, vector<1x4x256xf32>
    %3 = vector.shape_cast %2 : vector<1x4x256xf32> to vector<4x256xf32>
    %4 = vector.extract_strided_slice %1 {offsets = [0, 0], sizes = [24, 4], strides = [1, 1]} : vector<28x24xf32> to vector<24x4xf32>
    %cst = arith.constant dense<0.000000e+00> : vector<24x256xf32>
    %5 = tpu.matmul %4, %3, %cst {dimension_numbers = #tpu.dot_dimension_numbers<[1], [0], [0], [1], [0, 0, 1, 1], [], []>} : vector<24x4xf32>, vector<4x256xf32>, vector<24x256xf32> -> vector<24x256xf32>
    %6 = vector.extract_strided_slice %0 {offsets = [0, 9], sizes = [24, 1], strides = [1, 1]} : vector<25x18xf32> to vector<24x1xf32>
    %7 = vector.broadcast %6 : vector<24x1xf32> to vector<24x256xf32>
    %8 = arith.mulf %5, %7 : vector<24x256xf32>
    %9 = vector.extract_strided_slice %0 {offsets = [0, 10], sizes = [24, 1], strides = [1, 1]} : vector<25x18xf32> to vector<24x1xf32>
    %10 = vector.broadcast %9 : vector<24x1xf32> to vector<24x256xf32>
    %11 = arith.addf %8, %10 : vector<24x256xf32>
    %12 = arith.negf %11 : vector<24x256xf32>
    %13 = math.exp %12 : vector<24x256xf32>
    %cst_6 = arith.constant 1.000000e+00 : f32
    %14 = vector.broadcast %cst_6 : f32 to vector<24x256xf32>
    %15 = arith.addf %14, %13 : vector<24x256xf32>
    %16 = arith.divf %14, %15 : vector<24x256xf32>
    %17 = arith.mulf %11, %16 : vector<24x256xf32>
    %cst_7 = arith.constant 0.000000e+00 : f32
    %18 = vector.broadcast %cst_7 : f32 to vector<24x32xf32>
    %19 = tpu.concatenate %18, %17, %18 in 1 : vector<24x32xf32>, vector<24x256xf32>, vector<24x32xf32> -> vector<24x320xf32>
    %20 = tpu.iota {dimensions = array<i32: 1>} : vector<1x256xi32>
    %c15_i32 = arith.constant 15 : i32
    %21 = vector.broadcast %c15_i32 : i32 to vector<1x256xi32>
    %22 = arith.andi %20, %21 : vector<1x256xi32>
    %cst_8 = arith.constant 0.000000e+00 : f32
    %23 = vector.broadcast %cst_8 : f32 to vector<24x256xf32>
    %cst_9 = arith.constant 0.000000e+00 : f32
    %24 = vector.broadcast %cst_9 : f32 to vector<24x256xf32>
    %25 = vector.extract_strided_slice %19 {offsets = [0, 15], sizes = [24, 256], strides = [1, 1]} : vector<24x320xf32> to vector<24x256xf32>
    %26 = vector.extract_strided_slice %0 {offsets = [0, 0], sizes = [24, 1], strides = [1, 1]} : vector<25x18xf32> to vector<24x1xf32>
    %27 = vector.broadcast %26 : vector<24x1xf32> to vector<24x256xf32>
    %28 = arith.mulf %25, %27 : vector<24x256xf32>
    %29 = arith.addf %24, %28 : vector<24x256xf32>
    %30 = vector.extract_strided_slice %19 {offsets = [0, 31], sizes = [24, 256], strides = [1, 1]} : vector<24x320xf32> to vector<24x256xf32>
    %31 = vector.extract_strided_slice %0 {offsets = [0, 3], sizes = [24, 1], strides = [1, 1]} : vector<25x18xf32> to vector<24x1xf32>
    %32 = vector.broadcast %31 : vector<24x1xf32> to vector<24x256xf32>
    %33 = arith.mulf %30, %32 : vector<24x256xf32>
    %34 = arith.addf %29, %33 : vector<24x256xf32>
    %35 = vector.extract_strided_slice %19 {offsets = [0, 47], sizes = [24, 256], strides = [1, 1]} : vector<24x320xf32> to vector<24x256xf32>
    %36 = vector.extract_strided_slice %0 {offsets = [0, 6], sizes = [24, 1], strides = [1, 1]} : vector<25x18xf32> to vector<24x1xf32>
    %37 = vector.broadcast %36 : vector<24x1xf32> to vector<24x256xf32>
    %38 = arith.mulf %35, %37 : vector<24x256xf32>
    %39 = arith.addf %34, %38 : vector<24x256xf32>
    %c1_i32 = arith.constant 1 : i32
    %40 = vector.broadcast %c1_i32 : i32 to vector<1x256xi32>
    %41 = arith.cmpi sge, %22, %40 : vector<1x256xi32>
    %cst_10 = arith.constant 0.000000e+00 : f32
    %42 = vector.shape_cast %41 : vector<1x256xi1> to vector<1x256xi1>
    %43 = vector.broadcast %42 : vector<1x256xi1> to vector<24x256xi1>
    %44 = vector.broadcast %cst_10 : f32 to vector<24x256xf32>
    %45 = arith.select %43, %39, %44 : vector<24x256xi1>, vector<24x256xf32>
    %46 = arith.addf %23, %45 : vector<24x256xf32>
    %cst_11 = arith.constant 0.000000e+00 : f32
    %47 = vector.broadcast %cst_11 : f32 to vector<24x256xf32>
    %48 = vector.extract_strided_slice %19 {offsets = [0, 16], sizes = [24, 256], strides = [1, 1]} : vector<24x320xf32> to vector<24x256xf32>
    %49 = vector.extract_strided_slice %0 {offsets = [0, 1], sizes = [24, 1], strides = [1, 1]} : vector<25x18xf32> to vector<24x1xf32>
    %50 = vector.broadcast %49 : vector<24x1xf32> to vector<24x256xf32>
    %51 = arith.mulf %48, %50 : vector<24x256xf32>
    %52 = arith.addf %47, %51 : vector<24x256xf32>
    %53 = vector.extract_strided_slice %19 {offsets = [0, 32], sizes = [24, 256], strides = [1, 1]} : vector<24x320xf32> to vector<24x256xf32>
    %54 = vector.extract_strided_slice %0 {offsets = [0, 4], sizes = [24, 1], strides = [1, 1]} : vector<25x18xf32> to vector<24x1xf32>
    %55 = vector.broadcast %54 : vector<24x1xf32> to vector<24x256xf32>
    %56 = arith.mulf %53, %55 : vector<24x256xf32>
    %57 = arith.addf %52, %56 : vector<24x256xf32>
    %58 = vector.extract_strided_slice %19 {offsets = [0, 48], sizes = [24, 256], strides = [1, 1]} : vector<24x320xf32> to vector<24x256xf32>
    %59 = vector.extract_strided_slice %0 {offsets = [0, 7], sizes = [24, 1], strides = [1, 1]} : vector<25x18xf32> to vector<24x1xf32>
    %60 = vector.broadcast %59 : vector<24x1xf32> to vector<24x256xf32>
    %61 = arith.mulf %58, %60 : vector<24x256xf32>
    %62 = arith.addf %57, %61 : vector<24x256xf32>
    %63 = arith.addf %46, %62 : vector<24x256xf32>
    %cst_12 = arith.constant 0.000000e+00 : f32
    %64 = vector.broadcast %cst_12 : f32 to vector<24x256xf32>
    %65 = vector.extract_strided_slice %19 {offsets = [0, 17], sizes = [24, 256], strides = [1, 1]} : vector<24x320xf32> to vector<24x256xf32>
    %66 = vector.extract_strided_slice %0 {offsets = [0, 2], sizes = [24, 1], strides = [1, 1]} : vector<25x18xf32> to vector<24x1xf32>
    %67 = vector.broadcast %66 : vector<24x1xf32> to vector<24x256xf32>
    %68 = arith.mulf %65, %67 : vector<24x256xf32>
    %69 = arith.addf %64, %68 : vector<24x256xf32>
    %70 = vector.extract_strided_slice %19 {offsets = [0, 33], sizes = [24, 256], strides = [1, 1]} : vector<24x320xf32> to vector<24x256xf32>
    %71 = vector.extract_strided_slice %0 {offsets = [0, 5], sizes = [24, 1], strides = [1, 1]} : vector<25x18xf32> to vector<24x1xf32>
    %72 = vector.broadcast %71 : vector<24x1xf32> to vector<24x256xf32>
    %73 = arith.mulf %70, %72 : vector<24x256xf32>
    %74 = arith.addf %69, %73 : vector<24x256xf32>
    %75 = vector.extract_strided_slice %19 {offsets = [0, 49], sizes = [24, 256], strides = [1, 1]} : vector<24x320xf32> to vector<24x256xf32>
    %76 = vector.extract_strided_slice %0 {offsets = [0, 8], sizes = [24, 1], strides = [1, 1]} : vector<25x18xf32> to vector<24x1xf32>
    %77 = vector.broadcast %76 : vector<24x1xf32> to vector<24x256xf32>
    %78 = arith.mulf %75, %77 : vector<24x256xf32>
    %79 = arith.addf %74, %78 : vector<24x256xf32>
    %c15_i32_13 = arith.constant 15 : i32
    %80 = vector.broadcast %c15_i32_13 : i32 to vector<1x256xi32>
    %81 = arith.cmpi slt, %22, %80 : vector<1x256xi32>
    %cst_14 = arith.constant 0.000000e+00 : f32
    %82 = vector.shape_cast %81 : vector<1x256xi1> to vector<1x256xi1>
    %83 = vector.broadcast %82 : vector<1x256xi1> to vector<24x256xi1>
    %84 = vector.broadcast %cst_14 : f32 to vector<24x256xf32>
    %85 = arith.select %83, %79, %84 : vector<24x256xi1>, vector<24x256xf32>
    %86 = arith.addf %63, %85 : vector<24x256xf32>
    %87 = vector.extract_strided_slice %0 {offsets = [0, 11], sizes = [24, 1], strides = [1, 1]} : vector<25x18xf32> to vector<24x1xf32>
    %88 = vector.broadcast %87 : vector<24x1xf32> to vector<24x256xf32>
    %89 = arith.mulf %86, %88 : vector<24x256xf32>
    %90 = vector.extract_strided_slice %0 {offsets = [0, 12], sizes = [24, 1], strides = [1, 1]} : vector<25x18xf32> to vector<24x1xf32>
    %91 = vector.broadcast %90 : vector<24x1xf32> to vector<24x256xf32>
    %92 = arith.addf %89, %91 : vector<24x256xf32>
    %93 = arith.negf %92 : vector<24x256xf32>
    %94 = math.exp %93 : vector<24x256xf32>
    %cst_15 = arith.constant 1.000000e+00 : f32
    %95 = vector.broadcast %cst_15 : f32 to vector<24x256xf32>
    %96 = arith.addf %95, %94 : vector<24x256xf32>
    %97 = arith.divf %95, %96 : vector<24x256xf32>
    %98 = arith.mulf %92, %97 : vector<24x256xf32>
    %cst_16 = arith.constant dense<0.000000e+00> : vector<24xf32>
    %99 = vector.multi_reduction <add>, %98, %cst_16 [1] : vector<24x256xf32> to vector<24xf32>
    %100 = vector.shape_cast %99 : vector<24xf32> to vector<24x1xf32>
    %cst_17 = arith.constant 3.906250e-03 : f32
    %101 = vector.broadcast %cst_17 : f32 to vector<24x1xf32>
    %102 = arith.mulf %100, %101 : vector<24x1xf32>
    %103 = vector.extract_strided_slice %0 {offsets = [0, 16], sizes = [24, 1], strides = [1, 1]} : vector<25x18xf32> to vector<24x1xf32>
    %104 = arith.mulf %102, %103 : vector<24x1xf32>
    %cst_18 = arith.constant dense<0.000000e+00> : vector<1xf32>
    %105 = vector.multi_reduction <add>, %104, %cst_18 [0] : vector<24x1xf32> to vector<1xf32>
    %106 = vector.shape_cast %105 : vector<1xf32> to vector<1x1xf32>
    %107 = vector.extract_strided_slice %0 {offsets = [24, 16], sizes = [1, 1], strides = [1, 1]} : vector<25x18xf32> to vector<1x1xf32>
    %108 = arith.addf %106, %107 : vector<1x1xf32>
    %109 = arith.negf %108 : vector<1x1xf32>
    %110 = math.exp %109 : vector<1x1xf32>
    %cst_19 = arith.constant 1.000000e+00 : f32
    %111 = vector.broadcast %cst_19 : f32 to vector<1x1xf32>
    %112 = arith.addf %111, %110 : vector<1x1xf32>
    %113 = arith.divf %111, %112 : vector<1x1xf32>
    %114 = arith.mulf %108, %113 : vector<1x1xf32>
    %115 = vector.extract_strided_slice %0 {offsets = [0, 17], sizes = [24, 1], strides = [1, 1]} : vector<25x18xf32> to vector<24x1xf32>
    %116 = vector.broadcast %114 : vector<1x1xf32> to vector<24x1xf32>
    %117 = arith.mulf %115, %116 : vector<24x1xf32>
    %cst_20 = arith.constant dense<0.000000e+00> : vector<24xf32>
    %118 = vector.multi_reduction <add>, %117, %cst_20 [1] : vector<24x1xf32> to vector<24xf32>
    %119 = vector.shape_cast %118 : vector<24xf32> to vector<24x1xf32>
    %120 = vector.extract_strided_slice %0 {offsets = [0, 15], sizes = [24, 1], strides = [1, 1]} : vector<25x18xf32> to vector<24x1xf32>
    %121 = arith.addf %119, %120 : vector<24x1xf32>
    %122 = arith.negf %121 : vector<24x1xf32>
    %123 = math.exp %122 : vector<24x1xf32>
    %cst_21 = arith.constant 1.000000e+00 : f32
    %124 = vector.broadcast %cst_21 : f32 to vector<24x1xf32>
    %125 = arith.addf %124, %123 : vector<24x1xf32>
    %126 = arith.divf %124, %125 : vector<24x1xf32>
    %127 = vector.broadcast %126 : vector<24x1xf32> to vector<24x256xf32>
    %128 = arith.mulf %98, %127 : vector<24x256xf32>
    %129 = vector.extract_strided_slice %1 {offsets = [24, 0], sizes = [4, 24], strides = [1, 1]} : vector<28x24xf32> to vector<4x24xf32>
    %cst_22 = arith.constant dense<0.000000e+00> : vector<4x256xf32>
    %130 = tpu.matmul %129, %128, %cst_22 {dimension_numbers = #tpu.dot_dimension_numbers<[1], [0], [0], [1], [0, 0, 1, 1], [], []>} : vector<4x24xf32>, vector<24x256xf32>, vector<4x256xf32> -> vector<4x256xf32>
    %131 = vector.extract_strided_slice %0 {offsets = [0, 13], sizes = [4, 1], strides = [1, 1]} : vector<25x18xf32> to vector<4x1xf32>
    %132 = vector.broadcast %131 : vector<4x1xf32> to vector<4x256xf32>
    %133 = arith.mulf %130, %132 : vector<4x256xf32>
    %134 = vector.extract_strided_slice %0 {offsets = [0, 14], sizes = [4, 1], strides = [1, 1]} : vector<25x18xf32> to vector<4x1xf32>
    %135 = vector.broadcast %134 : vector<4x1xf32> to vector<4x256xf32>
    %136 = arith.addf %133, %135 : vector<4x256xf32>
    %137 = arith.addf %136, %3 : vector<4x256xf32>
    %c0_23 = arith.constant 0 : index
    %c0_24 = arith.constant 0 : index
    %c0_25 = arith.constant 0 : index
    %138 = vector.load %arg4[%c0_23, %c0_24, %c0_25] : memref<1x4x256xf32, #tpu.memory_space<vmem>>, vector<1x4x256xf32>
    %139 = vector.shape_cast %138 : vector<1x4x256xf32> to vector<4x256xf32>
    %140 = vector.shape_cast %137 : vector<4x256xf32> to vector<1x4x256xf32>
    tpu.vector_store %arg4[%c0_23, %c0_24, %c0_25], %140 {strides = array<i32>} : memref<1x4x256xf32, #tpu.memory_space<vmem>>, vector<1x4x256xf32>,
    return
  }
  func.func @transform_0(%arg0: i32) -> (i32, i32, i32) {
    %c0_i32 = arith.constant 0 : i32
    %c0_i32_0 = arith.constant 0 : i32
    %c0_i32_1 = arith.constant 0 : i32
    return %arg0, %c0_i32, %c0_i32_0 : i32, i32, i32
  }
  func.func @transform_1(%arg0: i32) -> (i32, i32) {
    %c0_i32 = arith.constant 0 : i32
    %c0_i32_0 = arith.constant 0 : i32
    %c0_i32_1 = arith.constant 0 : i32
    return %c0_i32, %c0_i32_0 : i32, i32
  }
  func.func @transform_2(%arg0: i32) -> (i32, i32) {
    %c0_i32 = arith.constant 0 : i32
    %c0_i32_0 = arith.constant 0 : i32
    %c0_i32_1 = arith.constant 0 : i32
    return %c0_i32, %c0_i32_0 : i32, i32
  }
  func.func @transform_3(%arg0: i32) -> (i32, i32, i32) {
    %c0_i32 = arith.constant 0 : i32
    %c0_i32_0 = arith.constant 0 : i32
    %c0_i32_1 = arith.constant 0 : i32
    return %arg0, %c0_i32, %c0_i32_0 : i32, i32, i32
  }
}

</mosaic_0001>

<llo_original>
// kernel: tpu_custom_call.1
$region0: #{tpu_custom_call.1}
  #allocation0 [shape = 'u32[]', space=smem, size = 0x4, offset = 0x4, fixed_abs, tag = 'smem constant byte address 0x4 - core index']
  #allocation1 [shape = 'u32[144,128]{1,0:T(1,128)}', space=vmem, size = 0x12000, scoped, tag = 'internal scratch']
  %s0 = inlined_call_operand.vmem [shape: f32[2,4,256], index: 0, kind: input, shape index: {}]
  %s1 = inlined_call_operand.vmem [shape: f32[28,24], index: 1, kind: input, shape index: {}]
  %s2 = inlined_call_operand.vmem [shape: f32[25,18], index: 2, kind: input, shape index: {}]
  %s3 = inlined_call_operand.hbm [shape: f32[2,4,256], index: 3, kind: output, shape index: {}]
  %s4 = sld [smem:[#allocation0]]
  $region45: #{tpu_custom_call.1} parent=0
    _
  %s6 = ssub.s32 1, %s4
  %s7 = scalar_select 0, %s6, %s4
  $region1: #{tpu_custom_call.1} parent=0
    #allocation2 [shape = 'u8[8192]{0}', space=vmem, size = 0x2000, scoped, tag = 'output window, operand 0']
    #allocation3 [shape = 's32[2]{0}', space=sflag, size = 0x8, scoped, tag = 'scoped memory for tpu_custom_call.1']
    %8 = vsyncpa [#allocation3], 0
    %s9 = scalar_lea.sflag [#allocation3], 1
    %10 = vsyncpa %s9, 0
    loop: start=0, step=1, limit=4
    $region2: #{tpu_custom_call.1} parent=1 // loop_pre_header
      _
    $region3: #{tpu_custom_call.1} parent=1 // loop_header
      %s12 = sphi 0, %s16
      %p13 = scmp.ge.s32.totalorder %s12, 4
      %s22 = sphi 0, %s24
      %s25 = sphi 0, %s22
      %s26 = sphi 0, %s25
      %s42 = sphi 0, %s26
      %s46 = sphi 0, %s46
      %s48 = sphi 0, %s46
      %s49 = sphi 0, %s48
      %s63 = sphi 0, %s49
      %s67 = sphi 0, %s67
      %s69 = sphi 0, %s67
      %s70 = sphi 0, %s69
      %s84 = sphi 0, %s70
      %s90 = sphi 0, %s92
      %s93 = sphi 0, %s90
      %s94 = sphi 0, %s93
      %s110 = sphi 0, %s94
    $region4: #{tpu_custom_call.1} parent=1 // loop_header_branch
      %15 = sbr.rel (%p13) target = $region8
    $region5: #{tpu_custom_call.1} parent=1 // loop_body
      %s17 = ssub.s32 %s12, 1
      %s18 = ssub.s32 %s12, 2
      %s19 = sadd.s32 %s12, 1
      %s20 = ssub.s32 %s12, %s19
      %p21 = scmp.eq.s32.totalorder %s20, 0
      %s23 = sadd.s32 %s22, 1
      %s24 = scalar_select %p21, %s22, %s23
      %p27 = pneg %p21
      %p28 = scmp.eq.s32.totalorder %s12, 1
      %p29 = por %p27, %p28
      %p30 = scmp.ne.s32.totalorder %s22, %s25
      %p31 = scmp.eq.s32.totalorder %s12, 0
      %p32 = por %p30, %p31
      %p33 = scmp.ne.s32.totalorder %s22, %s25
      %p34 = scmp.eq.s32.totalorder %s17, 1
      %p35 = por %p33, %p34
      %p36 = scmp.ne.s32.totalorder %s25, %s26
      %p37 = scmp.eq.s32.totalorder %s17, 0
      %p38 = por %p36, %p37
      %p39 = scmp.ne.s32.totalorder %s25, %s26
      %p40 = scmp.eq.s32.totalorder %s18, 1
      %p41 = por %p39, %p40
      %p43 = scmp.ne.s32.totalorder %s26, %s42
      %p44 = scmp.eq.s32.totalorder %s18, 0
      %p45 = por %p43, %p44
      %s47 = sadd.s32 %s46, 1
      %p50 = scmp.eq.s32.totalorder %s12, 1
      %p51 = scmp.ne.s32.totalorder %s46, %s48
      %p52 = scmp.eq.s32.totalorder %s12, 0
      %p53 = por %p51, %p52
      %p54 = scmp.ne.s32.totalorder %s46, %s48
      %p55 = scmp.eq.s32.totalorder %s17, 1
      %p56 = por %p54, %p55
      %p57 = scmp.ne.s32.totalorder %s48, %s49
      %p58 = scmp.eq.s32.totalorder %s17, 0
      %p59 = por %p57, %p58
      %p60 = scmp.ne.s32.totalorder %s48, %s49
      %p61 = scmp.eq.s32.totalorder %s18, 1
      %p62 = por %p60, %p61
      %p64 = scmp.ne.s32.totalorder %s49, %s63
      %p65 = scmp.eq.s32.totalorder %s18, 0
      %p66 = por %p64, %p65
      %s68 = sadd.s32 %s67, 1
      %p71 = scmp.eq.s32.totalorder %s12, 1
      %p72 = scmp.ne.s32.totalorder %s67, %s69
      %p73 = scmp.eq.s32.totalorder %s12, 0
      %p74 = por %p72, %p73
      %p75 = scmp.ne.s32.totalorder %s67, %s69
      %p76 = scmp.eq.s32.totalorder %s17, 1
      %p77 = por %p75, %p76
      %p78 = scmp.ne.s32.totalorder %s69, %s70
      %p79 = scmp.eq.s32.totalorder %s17, 0
      %p80 = por %p78, %p79
      %p81 = scmp.ne.s32.totalorder %s69, %s70
      %p82 = scmp.eq.s32.totalorder %s18, 1
      %p83 = por %p81, %p82
      %p85 = scmp.ne.s32.totalorder %s70, %s84
      %p86 = scmp.eq.s32.totalorder %s18, 0
      %p87 = por %p85, %p86
      %s88 = ssub.s32 %s12, %s19
      %p89 = scmp.eq.s32.totalorder %s88, 0
      %s91 = sadd.s32 %s90, 1
      %s92 = scalar_select %p89, %s90, %s91
      %p95 = pneg %p89
      %p96 = scmp.eq.s32.totalorder %s12, 1
      %p97 = por %p95, %p96
      %p98 = scmp.ne.s32.totalorder %s90, %s93
      %p99 = scmp.eq.s32.totalorder %s12, 0
      %p100 = por %p98, %p99
      %p101 = scmp.ne.s32.totalorder %s90, %s93
      %p102 = scmp.eq.s32.totalorder %s17, 1
      %p103 = por %p101, %p102
      %p104 = scmp.ne.s32.totalorder %s93, %s94
      %p105 = scmp.eq.s32.totalorder %s17, 0
      %p106 = por %p104, %p105
      %p107 = scmp.ne.s32.totalorder %s93, %s94
      %p108 = scmp.eq.s32.totalorder %s18, 1
      %p109 = por %p107, %p108
      %p111 = scmp.ne.s32.totalorder %s94, %s110
      %p112 = scmp.eq.s32.totalorder %s18, 0
      %p113 = por %p111, %p112
      %p114 = scmp.le.s32.totalorder 1, %s12
      %p115 = scmp.lt.s32.totalorder %s12, 3
      %p116 = pnand %p114, %p115
      %p117 = pneg %p116
      // Predicated region
      $region9: #{tpu_custom_call.1} parent=5 // pred_check
        _
      $region10: #{tpu_custom_call.1} parent=5 // pred_check_branch
        %119 = sbr.rel (%p116) target = $region12
      $region11: #{tpu_custom_call.1} parent=5 // pred_region
        %s120 = ssub.s32 %s12, 1
        // Predicated region
        $region13: #{tpu_custom_call.1} parent=11 // pred_check
          %p121 = pneg %p59
        $region14: #{tpu_custom_call.1} parent=11 // pred_check_branch
          %123 = sbr.rel (%p121) target = $region16
        $region15: #{tpu_custom_call.1} parent=11 // pred_region
          _
        $region16: #{tpu_custom_call.1} parent=11 // pred_fallthru
          _
        // Predicated region
        $region17: #{tpu_custom_call.1} parent=11 // pred_check
          %p124 = pneg %p80
        $region18: #{tpu_custom_call.1} parent=11 // pred_check_branch
          %126 = sbr.rel (%p124) target = $region20
        $region19: #{tpu_custom_call.1} parent=11 // pred_region
          _
        $region20: #{tpu_custom_call.1} parent=11 // pred_fallthru
          _
      $region12: #{tpu_custom_call.1} parent=5 // pred_fallthru
        _
      %p127 = scmp.lt.s32.totalorder %s12, 2
      // Predicated region
      $region21: #{tpu_custom_call.1} parent=5 // pred_check
        %p128 = pneg %p127
      $region22: #{tpu_custom_call.1} parent=5 // pred_check_branch
        %130 = sbr.rel (%p128) target = $region24
      $region23: #{tpu_custom_call.1} parent=5 // pred_region
        // Predicated region
        $region25: #{tpu_custom_call.1} parent=23 // pred_check
          %p131 = pneg %p32
        $region26: #{tpu_custom_call.1} parent=23 // pred_check_branch
          %133 = sbr.rel (%p131) target = $region28
        $region27: #{tpu_custom_call.1} parent=23 // pred_region
          %p134 = scmp.lt.s32.totalorder %s12, 1
          %s135 = scalar_select %p134, %s12, 1
          %s136 = smul.addr %s135, 2
          %s137 = smul.addr %s136, 4
          %s138 = scalar_lea.vmem %s0, %s137
        $region28: #{tpu_custom_call.1} parent=23 // pred_fallthru
          _
      $region24: #{tpu_custom_call.1} parent=5 // pred_fallthru
        _
      %p139 = scmp.le.s32.totalorder 1, %s12
      %p140 = scmp.lt.s32.totalorder %s12, 3
      %p141 = pnand %p139, %p140
      %p142 = pneg %p141
      // Predicated region
      $region29: #{tpu_custom_call.1} parent=5 // pred_check
        _
      $region30: #{tpu_custom_call.1} parent=5 // pred_check_branch
        %144 = sbr.rel (%p141) target = $region32
      $region31: #{tpu_custom_call.1} parent=5 // pred_region
        %s145 = ssub.s32 %s12, 1
        %p146 = scmp.lt.s32.totalorder %s17, 1
        %s147 = scalar_select %p146, %s17, 1
        %s148 = smul.addr %s147, 2
        %s149 = smul.addr %s148, 4
        %s150 = scalar_lea.vmem %s0, %s149
        %p151 = pneg %p38
        %p152 = pneg %p35
        %p153 = pneg %p59
        %p154 = pneg %p56
        %p155 = pneg %p80
        %p156 = pneg %p77
        %p157 = pneg %p106
        %p158 = pneg %p103
        %s159 = sand.u32 %s93, 1
        %s160 = scalar_lea.sflag [#allocation3], %s159
        %s161 = sand.u32 %s93, 1
        %s162 = smul.addr %s161, 8
        %s163 = scalar_lea.vmem [#allocation2], %s162
        %p164 = scmp.lt.s32.totalorder %s17, 1
        %s165 = scalar_select %p164, %s17, 1
        %s166 = smul.addr %s165, 2
        %s167 = smul.addr %s166, 4
        %s168 = scalar_lea.vmem %s0, %s167
        %v169 = vld [vmem:[%s2] sm:$0xff]
        %v170 = vld [vmem:[%s2 + $0x8] sm:$0xff]
        %v171 = vld [vmem:[%s2 + $0x10] sm:$0xff]
        %v172 = vld [vmem:[%s2 + $0x18] sm:$0x1]
        %v173 = vld [vmem:[%s1] sm:$0xff]
        %v174 = vld [vmem:[%s1 + $0x8] sm:$0xff]
        %v175 = vld [vmem:[%s1 + $0x10] sm:$0xff]
        %v176 = vld [vmem:[%s1 + $0x18] sm:$0xf]
        %v177 = vld [vmem:[%s168] sm:$0xff]
        %v179 = vcombine.high %v177, %v177
        %vm180 = vcmask 31744
        %v182 = vsel %vm180, %v173, 0
        %v185 = vsel %vm180, %v174, 0
        %v188 = vsel %vm180, %v175, 0
        %vm190 = vcmask 1043456
        %v191 = vsel %vm190, %v177, 0
        %v193 = vsel %vm190, %v179, 0
        %195 = vmatprep.subr.mxu0 0.0
        %196 = vmatpush1.msra.mxu0 0.0
        %197 = vmatprep.subr.mxu0 0.0
        %198 = vmatpush1.msra.mxu0 0.0
        %199 = vmatprep.subr.mxu0 0.0
        %200 = vmatpush1.msra.mxu0 0.0
        %201 = vmatprep.subr.mxu0 0.0
        %202 = vmatpush1.msra.mxu0 0.0
        %203 = vmatprep.subr.mxu0 0.0
        %204 = vmatpush1.msra.mxu0 0.0
        %205 = vmatprep.subr.mxu0 0.0
        %206 = vmatpush1.msra.mxu0 0.0
        %207 = vmatprep.subr.mxu0 0.0
        %208 = vmatpush1.msra.mxu0 0.0
        %209 = vmatprep.subr.mxu0 0.0
        %210 = vmatpush1.msra.mxu0 0.0
        %211 = vmatprep.subr.mxu0 0.0
        %212 = vmatpush1.msra.mxu0 0.0
        %213 = vmatprep.subr.mxu0 0.0
        %214 = vmatpush1.msra.mxu0 0.0
        %215 = vmatprep.subr.mxu0 0.0
        %216 = vmatpush1.msra.mxu0 0.0
        %217 = vmatprep.subr.mxu0 0.0
        %218 = vmatpush1.msra.mxu0 0.0
        %219 = vmatprep.subr.mxu0 0.0
        %220 = vmatpush1.msra.mxu0 0.0
        %221 = vmatprep.subr.mxu0 0.0
        %222 = vmatpush1.msra.mxu0 0.0
        %223 = vmatprep.subr.mxu0 0.0
        %224 = vmatpush1.msra.mxu0 0.0
        %225 = vmatprep.subr.mxu0 %v193
        %226 = vmatpush1.msra.mxu0 %v191
        %227 = vmatprep.subr.mxu0 0.0
        %228 = vmatpush2.msra.mxu0 0.0
        %229 = vmatprep.subr.mxu0 0.0
        %230 = vmatpush2.msra.mxu0 0.0
        %231 = vmatprep.subr.mxu0 0.0
        %232 = vmatpush2.msra.mxu0 0.0
        %233 = vmatprep.subr.mxu0 0.0
        %234 = vmatpush2.msra.mxu0 0.0
        %235 = vmatprep.subr.mxu0 0.0
        %236 = vmatpush2.msra.mxu0 0.0
        %237 = vmatprep.subr.mxu0 0.0
        %238 = vmatpush2.msra.mxu0 0.0
        %239 = vmatprep.subr.mxu0 0.0
        %240 = vmatpush2.msra.mxu0 0.0
        %241 = vmatprep.subr.mxu0 0.0
        %242 = vmatpush2.msra.mxu0 0.0
        %243 = vmatprep.subr.mxu0 0.0
        %244 = vmatpush2.msra.mxu0 0.0
        %245 = vmatprep.subr.mxu0 0.0
        %246 = vmatpush2.msra.mxu0 0.0
        %247 = vmatprep.subr.mxu0 0.0
        %248 = vmatpush2.msra.mxu0 0.0
        %249 = vmatprep.subr.mxu0 0.0
        %250 = vmatpush2.msra.mxu0 0.0
        %251 = vmatprep.subr.mxu0 0.0
        %252 = vmatpush2.msra.mxu0 0.0
        %253 = vmatprep.subr.mxu0 0.0
        %254 = vmatpush2.msra.mxu0 0.0
        %255 = vmatprep.subr.mxu0 0.0
        %256 = vmatpush2.msra.mxu0 0.0
        %257 = vmatprep.subr.mxu0 0.0
        %258 = vmatpush2.msra.mxu0 0.0
        %259 = vmatprep.mubr.f32.mxu0 0.0
        %260 = vmatmul.mubr.f32.gmra.mxu0 %v182
        %v261 = vpop.f32.mrf.mxu0
        %v262 = vadd.f32 0.0, %v261
        %v263 = vpop.f32.mrf.mxu0
        %v264 = vadd.f32 0.0, %v263
        %265 = vmatprep.mubr.f32.mxu0 0.0
        %266 = vmatmul.mubr.f32.gmra.mxu0 %v185
        %v267 = vpop.f32.mrf.mxu0
        %v268 = vadd.f32 0.0, %v267
        %v269 = vpop.f32.mrf.mxu0
        %v270 = vadd.f32 0.0, %v269
        %271 = vmatprep.mubr.f32.mxu0 0.0
        %272 = vmatmul.mubr.f32.gmra.mxu0 %v188
        %v273 = vpop.f32.mrf.mxu0
        %v274 = vadd.f32 0.0, %v273
        %v275 = vpop.f32.mrf.mxu0
        %v276 = vadd.f32 0.0, %v275
        %277 = vdwg.mxu0
        %279 = vset.pattern.permute.xlu0 9
        %280 = vperm.xlu0 %279, %v169
        %v281 = vpop.permute.xlu0 %280
        %284 = vset.pattern.permute.xlu0 9
        %285 = vperm.xlu0 %284, %v170
        %v286 = vpop.permute.xlu0 %285
        %289 = vset.pattern.permute.xlu0 9
        %290 = vperm.xlu0 %289, %v171
        %v291 = vpop.permute.xlu0 %290
        %v293 = vmul.f32 %v262, %v281
        %v294 = vmul.f32 %v264, %v281
        %v295 = vmul.f32 %v268, %v286
        %v296 = vmul.f32 %v270, %v286
        %v297 = vmul.f32 %v274, %v291
        %v298 = vmul.f32 %v276, %v291
        %299 = vset.pattern.permute.xlu0 10
        %300 = vperm.xlu0 %299, %v169
        %v301 = vpop.permute.xlu0 %300
        %303 = vset.pattern.permute.xlu0 10
        %304 = vperm.xlu0 %303, %v170
        %v305 = vpop.permute.xlu0 %304
        %307 = vset.pattern.permute.xlu0 10
        %308 = vperm.xlu0 %307, %v171
        %v309 = vpop.permute.xlu0 %308
        %v311 = vadd.f32 %v293, %v301
        %v312 = vadd.f32 %v294, %v301
        %v313 = vadd.f32 %v295, %v305
        %v314 = vadd.f32 %v296, %v305
        %v315 = vadd.f32 %v297, %v309
        %v316 = vadd.f32 %v298, %v309
        %v317 = vxor.u32 %v311, 2147483648
        %v318 = vxor.u32 %v312, 2147483648
        %v319 = vxor.u32 %v313, 2147483648
        %v320 = vxor.u32 %v314, 2147483648
        %v321 = vxor.u32 %v315, 2147483648
        %v322 = vxor.u32 %v316, 2147483648
        %v323 = vmul.f32 %v317, 1.442695
        %v324 = vpow.pop %v323
        %v325 = vmul.f32 %v318, 1.442695
        %v326 = vpow.pop %v325
        %v327 = vmul.f32 %v319, 1.442695
        %v328 = vpow.pop %v327
        %v329 = vmul.f32 %v320, 1.442695
        %v330 = vpow.pop %v329
        %v331 = vmul.f32 %v321, 1.442695
        %v332 = vpow.pop %v331
        %v333 = vmul.f32 %v322, 1.442695
        %v334 = vpow.pop %v333
        %v335 = vadd.f32 %v324, 1.0
        %v336 = vadd.f32 %v326, 1.0
        %v337 = vadd.f32 %v328, 1.0
        %v338 = vadd.f32 %v330, 1.0
        %v339 = vadd.f32 %v332, 1.0
        %v340 = vadd.f32 %v334, 1.0
        %v341 = vrcp.pop %v335
        %v342 = vmul.f32 1.0, %v341
        %v343 = vrcp.pop %v336
        %v344 = vmul.f32 1.0, %v343
        %v345 = vrcp.pop %v337
        %v346 = vmul.f32 1.0, %v345
        %v347 = vrcp.pop %v338
        %v348 = vmul.f32 1.0, %v347
        %v349 = vrcp.pop %v339
        %v350 = vmul.f32 1.0, %v349
        %v351 = vrcp.pop %v340
        %v352 = vmul.f32 1.0, %v351
        %v353 = vmul.f32 %v311, %v342
        %v354 = vmul.f32 %v312, %v344
        %v355 = vmul.f32 %v313, %v346
        %v356 = vmul.f32 %v314, %v348
        %v357 = vmul.f32 %v315, %v350
        %v358 = vmul.f32 %v316, %v352
        %365 = vrot.lane.b32.xlu0 %v353, 32
        %v366 = vpop.permute.xlu0 %365
        %367 = vrot.lane.b32.xlu0 %v354, 32
        %v368 = vpop.permute.xlu0 %367
        %369 = vrot.lane.b32.xlu0 %v355, 32
        %v370 = vpop.permute.xlu0 %369
        %371 = vrot.lane.b32.xlu0 %v356, 32
        %v372 = vpop.permute.xlu0 %371
        %373 = vrot.lane.b32.xlu0 %v357, 32
        %v374 = vpop.permute.xlu0 %373
        %375 = vrot.lane.b32.xlu0 %v358, 32
        %v376 = vpop.permute.xlu0 %375
        %vm377 = vcmask 261120
        %v378 = vsel %vm377, %v366, %v368
        %v379 = vsel %vm377, %v370, %v372
        %v380 = vsel %vm377, %v374, %v376
        %v390 = vsel %vm377, 0.0, %v366
        %v391 = vsel %vm377, 0.0, %v370
        %v392 = vsel %vm377, 0.0, %v374
        %v393 = vsel %vm377, %v368, 0.0
        %v394 = vsel %vm377, %v372, 0.0
        %v395 = vsel %vm377, %v376, 0.0
        %v396 = vlaneseq
        %v397 = vand.u32 %v396, 127
        %v398 = vadd.s32 %v397, 128
        %v399 = vand.u32 %v397, 15
        %v400 = vand.u32 %v398, 15
        %401 = vset.pattern.permute.xlu0 0
        %402 = vperm.xlu0 %401, %v169
        %v403 = vpop.permute.xlu0 %402
        %405 = vset.pattern.permute.xlu0 0
        %406 = vperm.xlu0 %405, %v170
        %v407 = vpop.permute.xlu0 %406
        %409 = vset.pattern.permute.xlu0 0
        %410 = vperm.xlu0 %409, %v171
        %v411 = vpop.permute.xlu0 %410
        %v413 = vmul.f32 %v390, %v403
        %v414 = vmul.f32 %v378, %v403
        %v415 = vmul.f32 %v393, %v403
        %v416 = vmul.f32 %v391, %v407
        %v417 = vmul.f32 %v379, %v407
        %v418 = vmul.f32 %v394, %v407
        %v419 = vmul.f32 %v392, %v411
        %v420 = vmul.f32 %v380, %v411
        %v421 = vmul.f32 %v395, %v411
        %v422 = vadd.f32 %v413, 0.0
        %v423 = vadd.f32 %v414, 0.0
        %v424 = vadd.f32 %v415, 0.0
        %v425 = vadd.f32 %v416, 0.0
        %v426 = vadd.f32 %v417, 0.0
        %v427 = vadd.f32 %v418, 0.0
        %v428 = vadd.f32 %v419, 0.0
        %v429 = vadd.f32 %v420, 0.0
        %v430 = vadd.f32 %v421, 0.0
        %431 = vset.pattern.permute.xlu0 3
        %432 = vperm.xlu0 %431, %v169
        %v433 = vpop.permute.xlu0 %432
        %435 = vset.pattern.permute.xlu0 3
        %436 = vperm.xlu0 %435, %v170
        %v437 = vpop.permute.xlu0 %436
        %439 = vset.pattern.permute.xlu0 3
        %440 = vperm.xlu0 %439, %v171
        %v441 = vpop.permute.xlu0 %440
        %v443 = vmul.f32 %v390, %v433
        %v444 = vmul.f32 %v378, %v433
        %v445 = vmul.f32 %v393, %v433
        %v446 = vmul.f32 %v391, %v437
        %v447 = vmul.f32 %v379, %v437
        %v448 = vmul.f32 %v394, %v437
        %v449 = vmul.f32 %v392, %v441
        %v450 = vmul.f32 %v380, %v441
        %v451 = vmul.f32 %v395, %v441
        %461 = vrot.lane.b32.xlu0 %v443, 112
        %v462 = vpop.permute.xlu0 %461
        %463 = vrot.lane.b32.xlu0 %v444, 112
        %v464 = vpop.permute.xlu0 %463
        %465 = vrot.lane.b32.xlu0 %v445, 112
        %v466 = vpop.permute.xlu0 %465
        %467 = vrot.lane.b32.xlu0 %v446, 112
        %v468 = vpop.permute.xlu0 %467
        %469 = vrot.lane.b32.xlu0 %v447, 112
        %v470 = vpop.permute.xlu0 %469
        %471 = vrot.lane.b32.xlu0 %v448, 112
        %v472 = vpop.permute.xlu0 %471
        %473 = vrot.lane.b32.xlu0 %v449, 112
        %v474 = vpop.permute.xlu0 %473
        %475 = vrot.lane.b32.xlu0 %v450, 112
        %v476 = vpop.permute.xlu0 %475
        %477 = vrot.lane.b32.xlu0 %v451, 112
        %v478 = vpop.permute.xlu0 %477
        %vm479 = vcmask 916480
        %v480 = vsel %vm479, %v462, %v464
        %v481 = vsel %vm479, %v464, %v466
        %v482 = vsel %vm479, %v468, %v470
        %v483 = vsel %vm479, %v470, %v472
        %v484 = vsel %vm479, %v474, %v476
        %v485 = vsel %vm479, %v476, %v478
        %v495 = vadd.f32 %v422, %v480
        %v496 = vadd.f32 %v423, %v481
        %v497 = vadd.f32 %v424, %v466
        %v498 = vadd.f32 %v425, %v482
        %v499 = vadd.f32 %v426, %v483
        %v500 = vadd.f32 %v427, %v472
        %v501 = vadd.f32 %v428, %v484
        %v502 = vadd.f32 %v429, %v485
        %v503 = vadd.f32 %v430, %v478
        %504 = vset.pattern.permute.xlu0 6
        %505 = vperm.xlu0 %504, %v169
        %v506 = vpop.permute.xlu0 %505
        %508 = vset.pattern.permute.xlu0 6
        %509 = vperm.xlu0 %508, %v170
        %v510 = vpop.permute.xlu0 %509
        %512 = vset.pattern.permute.xlu0 6
        %513 = vperm.xlu0 %512, %v171
        %v514 = vpop.permute.xlu0 %513
        %v516 = vmul.f32 %v390, %v506
        %v517 = vmul.f32 %v378, %v506
        %v518 = vmul.f32 %v393, %v506
        %v519 = vmul.f32 %v391, %v510
        %v520 = vmul.f32 %v379, %v510
        %v521 = vmul.f32 %v394, %v510
        %v522 = vmul.f32 %v392, %v514
        %v523 = vmul.f32 %v380, %v514
        %v524 = vmul.f32 %v395, %v514
        %534 = vrot.lane.b32.xlu0 %v516, 96
        %v535 = vpop.permute.xlu0 %534
        %536 = vrot.lane.b32.xlu0 %v517, 96
        %v537 = vpop.permute.xlu0 %536
        %538 = vrot.lane.b32.xlu0 %v518, 96
        %v539 = vpop.permute.xlu0 %538
        %540 = vrot.lane.b32.xlu0 %v519, 96
        %v541 = vpop.permute.xlu0 %540
        %542 = vrot.lane.b32.xlu0 %v520, 96
        %v543 = vpop.permute.xlu0 %542
        %544 = vrot.lane.b32.xlu0 %v521, 96
        %v545 = vpop.permute.xlu0 %544
        %546 = vrot.lane.b32.xlu0 %v522, 96
        %v547 = vpop.permute.xlu0 %546
        %548 = vrot.lane.b32.xlu0 %v523, 96
        %v549 = vpop.permute.xlu0 %548
        %550 = vrot.lane.b32.xlu0 %v524, 96
        %v551 = vpop.permute.xlu0 %550
        %vm552 = vcmask 785408
        %v553 = vsel %vm552, %v535, %v537
        %v554 = vsel %vm552, %v537, %v539
        %v555 = vsel %vm552, %v541, %v543
        %v556 = vsel %vm552, %v543, %v545
        %v557 = vsel %vm552, %v547, %v549
        %v558 = vsel %vm552, %v549, %v551
        %v568 = vadd.f32 %v495, %v553
        %v569 = vadd.f32 %v496, %v554
        %v570 = vadd.f32 %v497, %v539
        %v571 = vadd.f32 %v498, %v555
        %v572 = vadd.f32 %v499, %v556
        %v573 = vadd.f32 %v500, %v545
        %v574 = vadd.f32 %v501, %v557
        %v575 = vadd.f32 %v502, %v558
        %v576 = vadd.f32 %v503, %v551
        %vm577 = vcmp.ge.s32.totalorder %v399, 1
        %vm578 = vcmp.ge.s32.totalorder %v400, 1
        %v579 = vsel %vm577, 1, 0
        %v580 = vsel %vm578, 1, 0
        %vm581 = vcmp.eq.s32.totalorder %v579, 1
        %vm582 = vcmp.eq.s32.totalorder %v580, 1
        %592 = vrot.lane.b32.xlu0 %v568, 113
        %v593 = vpop.permute.xlu0 %592
        %594 = vrot.lane.b32.xlu0 %v569, 113
        %v595 = vpop.permute.xlu0 %594
        %596 = vrot.lane.b32.xlu0 %v570, 113
        %v597 = vpop.permute.xlu0 %596
        %598 = vrot.lane.b32.xlu0 %v571, 113
        %v599 = vpop.permute.xlu0 %598
        %600 = vrot.lane.b32.xlu0 %v572, 113
        %v601 = vpop.permute.xlu0 %600
        %602 = vrot.lane.b32.xlu0 %v573, 113
        %v603 = vpop.permute.xlu0 %602
        %604 = vrot.lane.b32.xlu0 %v574, 113
        %v605 = vpop.permute.xlu0 %604
        %606 = vrot.lane.b32.xlu0 %v575, 113
        %v607 = vpop.permute.xlu0 %606
        %608 = vrot.lane.b32.xlu0 %v576, 113
        %v609 = vpop.permute.xlu0 %608
        %vm610 = vcmask 924672
        %v611 = vsel %vm610, %v593, %v595
        %v612 = vsel %vm610, %v595, %v597
        %v613 = vsel %vm610, %v599, %v601
        %v614 = vsel %vm610, %v601, %v603
        %v615 = vsel %vm610, %v605, %v607
        %v616 = vsel %vm610, %v607, %v609
        %v623 = vsel %vm581, %v611, 0.0
        %v624 = vsel %vm582, %v612, 0.0
        %v625 = vsel %vm581, %v613, 0.0
        %v626 = vsel %vm582, %v614, 0.0
        %v627 = vsel %vm581, %v615, 0.0
        %v628 = vsel %vm582, %v616, 0.0
        %v629 = vadd.f32 %v623, 0.0
        %v630 = vadd.f32 %v624, 0.0
        %v631 = vadd.f32 %v625, 0.0
        %v632 = vadd.f32 %v626, 0.0
        %v633 = vadd.f32 %v627, 0.0
        %v634 = vadd.f32 %v628, 0.0
        %635 = vset.pattern.permute.xlu0 1
        %636 = vperm.xlu0 %635, %v169
        %v637 = vpop.permute.xlu0 %636
        %639 = vset.pattern.permute.xlu0 1
        %640 = vperm.xlu0 %639, %v170
        %v641 = vpop.permute.xlu0 %640
        %643 = vset.pattern.permute.xlu0 1
        %644 = vperm.xlu0 %643, %v171
        %v645 = vpop.permute.xlu0 %644
        %v647 = vmul.f32 %v390, %v637
        %v648 = vmul.f32 %v378, %v637
        %v649 = vmul.f32 %v393, %v637
        %v650 = vmul.f32 %v391, %v641
        %v651 = vmul.f32 %v379, %v641
        %v652 = vmul.f32 %v394, %v641
        %v653 = vmul.f32 %v392, %v645
        %v654 = vmul.f32 %v380, %v645
        %v655 = vmul.f32 %v395, %v645
        %v656 = vadd.f32 %v647, 0.0
        %v657 = vadd.f32 %v648, 0.0
        %v658 = vadd.f32 %v649, 0.0
        %v659 = vadd.f32 %v650, 0.0
        %v660 = vadd.f32 %v651, 0.0
        %v661 = vadd.f32 %v652, 0.0
        %v662 = vadd.f32 %v653, 0.0
        %v663 = vadd.f32 %v654, 0.0
        %v664 = vadd.f32 %v655, 0.0
        %665 = vset.pattern.permute.xlu0 4
        %666 = vperm.xlu0 %665, %v169
        %v667 = vpop.permute.xlu0 %666
        %669 = vset.pattern.permute.xlu0 4
        %670 = vperm.xlu0 %669, %v170
        %v671 = vpop.permute.xlu0 %670
        %673 = vset.pattern.permute.xlu0 4
        %674 = vperm.xlu0 %673, %v171
        %v675 = vpop.permute.xlu0 %674
        %v677 = vmul.f32 %v390, %v667
        %v678 = vmul.f32 %v378, %v667
        %v679 = vmul.f32 %v393, %v667
        %v680 = vmul.f32 %v391, %v671
        %v681 = vmul.f32 %v379, %v671
        %v682 = vmul.f32 %v394, %v671
        %v683 = vmul.f32 %v392, %v675
        %v684 = vmul.f32 %v380, %v675
        %v685 = vmul.f32 %v395, %v675
        %695 = vrot.lane.b32.xlu0 %v677, 112
        %v696 = vpop.permute.xlu0 %695
        %697 = vrot.lane.b32.xlu0 %v678, 112
        %v698 = vpop.permute.xlu0 %697
        %699 = vrot.lane.b32.xlu0 %v679, 112
        %v700 = vpop.permute.xlu0 %699
        %701 = vrot.lane.b32.xlu0 %v680, 112
        %v702 = vpop.permute.xlu0 %701
        %703 = vrot.lane.b32.xlu0 %v681, 112
        %v704 = vpop.permute.xlu0 %703
        %705 = vrot.lane.b32.xlu0 %v682, 112
        %v706 = vpop.permute.xlu0 %705
        %707 = vrot.lane.b32.xlu0 %v683, 112
        %v708 = vpop.permute.xlu0 %707
        %709 = vrot.lane.b32.xlu0 %v684, 112
        %v710 = vpop.permute.xlu0 %709
        %711 = vrot.lane.b32.xlu0 %v685, 112
        %v712 = vpop.permute.xlu0 %711
        %v713 = vsel %vm479, %v696, %v698
        %v714 = vsel %vm479, %v698, %v700
        %v715 = vsel %vm479, %v702, %v704
        %v716 = vsel %vm479, %v704, %v706
        %v717 = vsel %vm479, %v708, %v710
        %v718 = vsel %vm479, %v710, %v712
        %v728 = vadd.f32 %v656, %v713
        %v729 = vadd.f32 %v657, %v714
        %v730 = vadd.f32 %v658, %v700
        %v731 = vadd.f32 %v659, %v715
        %v732 = vadd.f32 %v660, %v716
        %v733 = vadd.f32 %v661, %v706
        %v734 = vadd.f32 %v662, %v717
        %v735 = vadd.f32 %v663, %v718
        %v736 = vadd.f32 %v664, %v712
        %737 = vset.pattern.permute.xlu0 7
        %738 = vperm.xlu0 %737, %v169
        %v739 = vpop.permute.xlu0 %738
        %741 = vset.pattern.permute.xlu0 7
        %742 = vperm.xlu0 %741, %v170
        %v743 = vpop.permute.xlu0 %742
        %745 = vset.pattern.permute.xlu0 7
        %746 = vperm.xlu0 %745, %v171
        %v747 = vpop.permute.xlu0 %746
        %v749 = vmul.f32 %v390, %v739
        %v750 = vmul.f32 %v378, %v739
        %v751 = vmul.f32 %v393, %v739
        %v752 = vmul.f32 %v391, %v743
        %v753 = vmul.f32 %v379, %v743
        %v754 = vmul.f32 %v394, %v743
        %v755 = vmul.f32 %v392, %v747
        %v756 = vmul.f32 %v380, %v747
        %v757 = vmul.f32 %v395, %v747
        %767 = vrot.lane.b32.xlu0 %v749, 96
        %v768 = vpop.permute.xlu0 %767
        %769 = vrot.lane.b32.xlu0 %v750, 96
        %v770 = vpop.permute.xlu0 %769
        %771 = vrot.lane.b32.xlu0 %v751, 96
        %v772 = vpop.permute.xlu0 %771
        %773 = vrot.lane.b32.xlu0 %v752, 96
        %v774 = vpop.permute.xlu0 %773
        %775 = vrot.lane.b32.xlu0 %v753, 96
        %v776 = vpop.permute.xlu0 %775
        %777 = vrot.lane.b32.xlu0 %v754, 96
        %v778 = vpop.permute.xlu0 %777
        %779 = vrot.lane.b32.xlu0 %v755, 96
        %v780 = vpop.permute.xlu0 %779
        %781 = vrot.lane.b32.xlu0 %v756, 96
        %v782 = vpop.permute.xlu0 %781
        %783 = vrot.lane.b32.xlu0 %v757, 96
        %v784 = vpop.permute.xlu0 %783
        %v785 = vsel %vm552, %v768, %v770
        %v786 = vsel %vm552, %v770, %v772
        %v787 = vsel %vm552, %v774, %v776
        %v788 = vsel %vm552, %v776, %v778
        %v789 = vsel %vm552, %v780, %v782
        %v790 = vsel %vm552, %v782, %v784
        %v800 = vadd.f32 %v728, %v785
        %v801 = vadd.f32 %v729, %v786
        %v802 = vadd.f32 %v730, %v772
        %v803 = vadd.f32 %v731, %v787
        %v804 = vadd.f32 %v732, %v788
        %v805 = vadd.f32 %v733, %v778
        %v806 = vadd.f32 %v734, %v789
        %v807 = vadd.f32 %v735, %v790
        %v808 = vadd.f32 %v736, %v784
        %818 = vrot.lane.b32.xlu0 %v800, 112
        %v819 = vpop.permute.xlu0 %818
        %820 = vrot.lane.b32.xlu0 %v801, 112
        %v821 = vpop.permute.xlu0 %820
        %822 = vrot.lane.b32.xlu0 %v802, 112
        %v823 = vpop.permute.xlu0 %822
        %824 = vrot.lane.b32.xlu0 %v803, 112
        %v825 = vpop.permute.xlu0 %824
        %826 = vrot.lane.b32.xlu0 %v804, 112
        %v827 = vpop.permute.xlu0 %826
        %828 = vrot.lane.b32.xlu0 %v805, 112
        %v829 = vpop.permute.xlu0 %828
        %830 = vrot.lane.b32.xlu0 %v806, 112
        %v831 = vpop.permute.xlu0 %830
        %832 = vrot.lane.b32.xlu0 %v807, 112
        %v833 = vpop.permute.xlu0 %832
        %834 = vrot.lane.b32.xlu0 %v808, 112
        %v835 = vpop.permute.xlu0 %834
        %v836 = vsel %vm479, %v819, %v821
        %v837 = vsel %vm479, %v821, %v823
        %v838 = vsel %vm479, %v825, %v827
        %v839 = vsel %vm479, %v827, %v829
        %v840 = vsel %vm479, %v831, %v833
        %v841 = vsel %vm479, %v833, %v835
        %v848 = vadd.f32 %v629, %v836
        %v849 = vadd.f32 %v630, %v837
        %v850 = vadd.f32 %v631, %v838
        %v851 = vadd.f32 %v632, %v839
        %v852 = vadd.f32 %v633, %v840
        %v853 = vadd.f32 %v634, %v841
        %854 = vset.pattern.permute.xlu0 2
        %855 = vperm.xlu0 %854, %v169
        %v856 = vpop.permute.xlu0 %855
        %858 = vset.pattern.permute.xlu0 2
        %859 = vperm.xlu0 %858, %v170
        %v860 = vpop.permute.xlu0 %859
        %862 = vset.pattern.permute.xlu0 2
        %863 = vperm.xlu0 %862, %v171
        %v864 = vpop.permute.xlu0 %863
        %v866 = vmul.f32 %v390, %v856
        %v867 = vmul.f32 %v378, %v856
        %v868 = vmul.f32 %v393, %v856
        %v869 = vmul.f32 %v391, %v860
        %v870 = vmul.f32 %v379, %v860
        %v871 = vmul.f32 %v394, %v860
        %v872 = vmul.f32 %v392, %v864
        %v873 = vmul.f32 %v380, %v864
        %v874 = vmul.f32 %v395, %v864
        %v875 = vadd.f32 %v866, 0.0
        %v876 = vadd.f32 %v867, 0.0
        %v877 = vadd.f32 %v868, 0.0
        %v878 = vadd.f32 %v869, 0.0
        %v879 = vadd.f32 %v870, 0.0
        %v880 = vadd.f32 %v871, 0.0
        %v881 = vadd.f32 %v872, 0.0
        %v882 = vadd.f32 %v873, 0.0
        %v883 = vadd.f32 %v874, 0.0
        %884 = vset.pattern.permute.xlu0 5
        %885 = vperm.xlu0 %884, %v169
        %v886 = vpop.permute.xlu0 %885
        %888 = vset.pattern.permute.xlu0 5
        %889 = vperm.xlu0 %888, %v170
        %v890 = vpop.permute.xlu0 %889
        %892 = vset.pattern.permute.xlu0 5
        %893 = vperm.xlu0 %892, %v171
        %v894 = vpop.permute.xlu0 %893
        %v896 = vmul.f32 %v390, %v886
        %v897 = vmul.f32 %v378, %v886
        %v898 = vmul.f32 %v393, %v886
        %v899 = vmul.f32 %v391, %v890
        %v900 = vmul.f32 %v379, %v890
        %v901 = vmul.f32 %v394, %v890
        %v902 = vmul.f32 %v392, %v894
        %v903 = vmul.f32 %v380, %v894
        %v904 = vmul.f32 %v395, %v894
        %914 = vrot.lane.b32.xlu0 %v896, 112
        %v915 = vpop.permute.xlu0 %914
        %916 = vrot.lane.b32.xlu0 %v897, 112
        %v917 = vpop.permute.xlu0 %916
        %918 = vrot.lane.b32.xlu0 %v898, 112
        %v919 = vpop.permute.xlu0 %918
        %920 = vrot.lane.b32.xlu0 %v899, 112
        %v921 = vpop.permute.xlu0 %920
        %922 = vrot.lane.b32.xlu0 %v900, 112
        %v923 = vpop.permute.xlu0 %922
        %924 = vrot.lane.b32.xlu0 %v901, 112
        %v925 = vpop.permute.xlu0 %924
        %926 = vrot.lane.b32.xlu0 %v902, 112
        %v927 = vpop.permute.xlu0 %926
        %928 = vrot.lane.b32.xlu0 %v903, 112
        %v929 = vpop.permute.xlu0 %928
        %930 = vrot.lane.b32.xlu0 %v904, 112
        %v931 = vpop.permute.xlu0 %930
        %v932 = vsel %vm479, %v915, %v917
        %v933 = vsel %vm479, %v917, %v919
        %v934 = vsel %vm479, %v921, %v923
        %v935 = vsel %vm479, %v923, %v925
        %v936 = vsel %vm479, %v927, %v929
        %v937 = vsel %vm479, %v929, %v931
        %v947 = vadd.f32 %v875, %v932
        %v948 = vadd.f32 %v876, %v933
        %v949 = vadd.f32 %v877, %v919
        %v950 = vadd.f32 %v878, %v934
        %v951 = vadd.f32 %v879, %v935
        %v952 = vadd.f32 %v880, %v925
        %v953 = vadd.f32 %v881, %v936
        %v954 = vadd.f32 %v882, %v937
        %v955 = vadd.f32 %v883, %v931
        %956 = vset.pattern.permute.xlu0 8
        %957 = vperm.xlu0 %956, %v169
        %v958 = vpop.permute.xlu0 %957
        %960 = vset.pattern.permute.xlu0 8
        %961 = vperm.xlu0 %960, %v170
        %v962 = vpop.permute.xlu0 %961
        %964 = vset.pattern.permute.xlu0 8
        %965 = vperm.xlu0 %964, %v171
        %v966 = vpop.permute.xlu0 %965
        %v968 = vmul.f32 %v390, %v958
        %v969 = vmul.f32 %v378, %v958
        %v970 = vmul.f32 %v393, %v958
        %v971 = vmul.f32 %v391, %v962
        %v972 = vmul.f32 %v379, %v962
        %v973 = vmul.f32 %v394, %v962
        %v974 = vmul.f32 %v392, %v966
        %v975 = vmul.f32 %v380, %v966
        %v976 = vmul.f32 %v395, %v966
        %986 = vrot.lane.b32.xlu0 %v968, 96
        %v987 = vpop.permute.xlu0 %986
        %988 = vrot.lane.b32.xlu0 %v969, 96
        %v989 = vpop.permute.xlu0 %988
        %990 = vrot.lane.b32.xlu0 %v970, 96
        %v991 = vpop.permute.xlu0 %990
        %992 = vrot.lane.b32.xlu0 %v971, 96
        %v993 = vpop.permute.xlu0 %992
        %994 = vrot.lane.b32.xlu0 %v972, 96
        %v995 = vpop.permute.xlu0 %994
        %996 = vrot.lane.b32.xlu0 %v973, 96
        %v997 = vpop.permute.xlu0 %996
        %998 = vrot.lane.b32.xlu0 %v974, 96
        %v999 = vpop.permute.xlu0 %998
        %1000 = vrot.lane.b32.xlu0 %v975, 96
        %v1001 = vpop.permute.xlu0 %1000
        %1002 = vrot.lane.b32.xlu0 %v976, 96
        %v1003 = vpop.permute.xlu0 %1002
        %v1004 = vsel %vm552, %v987, %v989
        %v1005 = vsel %vm552, %v989, %v991
        %v1006 = vsel %vm552, %v993, %v995
        %v1007 = vsel %vm552, %v995, %v997
        %v1008 = vsel %vm552, %v999, %v1001
        %v1009 = vsel %vm552, %v1001, %v1003
        %v1019 = vadd.f32 %v947, %v1004
        %v1020 = vadd.f32 %v948, %v1005
        %v1021 = vadd.f32 %v949, %v991
        %v1022 = vadd.f32 %v950, %v1006
        %v1023 = vadd.f32 %v951, %v1007
        %v1024 = vadd.f32 %v952, %v997
        %v1025 = vadd.f32 %v953, %v1008
        %v1026 = vadd.f32 %v954, %v1009
        %v1027 = vadd.f32 %v955, %v1003
        %vm1028 = vcmp.lt.s32.totalorder %v399, 15
        %vm1029 = vcmp.lt.s32.totalorder %v400, 15
        %v1030 = vsel %vm1028, 1, 0
        %v1031 = vsel %vm1029, 1, 0
        %vm1032 = vcmp.eq.s32.totalorder %v1030, 1
        %vm1033 = vcmp.eq.s32.totalorder %v1031, 1
        %1043 = vrot.lane.b32.xlu0 %v1019, 111
        %v1044 = vpop.permute.xlu0 %1043
        %1045 = vrot.lane.b32.xlu0 %v1020, 111
        %v1046 = vpop.permute.xlu0 %1045
        %1047 = vrot.lane.b32.xlu0 %v1021, 111
        %v1048 = vpop.permute.xlu0 %1047
        %1049 = vrot.lane.b32.xlu0 %v1022, 111
        %v1050 = vpop.permute.xlu0 %1049
        %1051 = vrot.lane.b32.xlu0 %v1023, 111
        %v1052 = vpop.permute.xlu0 %1051
        %1053 = vrot.lane.b32.xlu0 %v1024, 111
        %v1054 = vpop.permute.xlu0 %1053
        %1055 = vrot.lane.b32.xlu0 %v1025, 111
        %v1056 = vpop.permute.xlu0 %1055
        %1057 = vrot.lane.b32.xlu0 %v1026, 111
        %v1058 = vpop.permute.xlu0 %1057
        %1059 = vrot.lane.b32.xlu0 %v1027, 111
        %v1060 = vpop.permute.xlu0 %1059
        %vm1061 = vcmask 908288
        %v1062 = vsel %vm1061, %v1044, %v1046
        %v1063 = vsel %vm1061, %v1046, %v1048
        %v1064 = vsel %vm1061, %v1050, %v1052
        %v1065 = vsel %vm1061, %v1052, %v1054
        %v1066 = vsel %vm1061, %v1056, %v1058
        %v1067 = vsel %vm1061, %v1058, %v1060
        %v1074 = vsel %vm1032, %v1062, 0.0
        %v1075 = vsel %vm1033, %v1063, 0.0
        %v1076 = vsel %vm1032, %v1064, 0.0
        %v1077 = vsel %vm1033, %v1065, 0.0
        %v1078 = vsel %vm1032, %v1066, 0.0
        %v1079 = vsel %vm1033, %v1067, 0.0
        %v1080 = vadd.f32 %v848, %v1074
        %v1081 = vadd.f32 %v849, %v1075
        %v1082 = vadd.f32 %v850, %v1076
        %v1083 = vadd.f32 %v851, %v1077
        %v1084 = vadd.f32 %v852, %v1078
        %v1085 = vadd.f32 %v853, %v1079
        %1086 = vset.pattern.permute.xlu0 11
        %1087 = vperm.xlu0 %1086, %v169
        %v1088 = vpop.permute.xlu0 %1087
        %1090 = vset.pattern.permute.xlu0 11
        %1091 = vperm.xlu0 %1090, %v170
        %v1092 = vpop.permute.xlu0 %1091
        %1094 = vset.pattern.permute.xlu0 11
        %1095 = vperm.xlu0 %1094, %v171
        %v1096 = vpop.permute.xlu0 %1095
        %v1098 = vmul.f32 %v1080, %v1088
        %v1099 = vmul.f32 %v1081, %v1088
        %v1100 = vmul.f32 %v1082, %v1092
        %v1101 = vmul.f32 %v1083, %v1092
        %v1102 = vmul.f32 %v1084, %v1096
        %v1103 = vmul.f32 %v1085, %v1096
        %1104 = vset.pattern.permute.xlu0 12
        %1105 = vperm.xlu0 %1104, %v169
        %v1106 = vpop.permute.xlu0 %1105
        %1108 = vset.pattern.permute.xlu0 12
        %1109 = vperm.xlu0 %1108, %v170
        %v1110 = vpop.permute.xlu0 %1109
        %1112 = vset.pattern.permute.xlu0 12
        %1113 = vperm.xlu0 %1112, %v171
        %v1114 = vpop.permute.xlu0 %1113
        %v1116 = vadd.f32 %v1098, %v1106
        %v1117 = vadd.f32 %v1099, %v1106
        %v1118 = vadd.f32 %v1100, %v1110
        %v1119 = vadd.f32 %v1101, %v1110
        %v1120 = vadd.f32 %v1102, %v1114
        %v1121 = vadd.f32 %v1103, %v1114
        %v1122 = vxor.u32 %v1116, 2147483648
        %v1123 = vxor.u32 %v1117, 2147483648
        %v1124 = vxor.u32 %v1118, 2147483648
        %v1125 = vxor.u32 %v1119, 2147483648
        %v1126 = vxor.u32 %v1120, 2147483648
        %v1127 = vxor.u32 %v1121, 2147483648
        %v1128 = vmul.f32 %v1122, 1.442695
        %v1129 = vpow.pop %v1128
        %v1130 = vmul.f32 %v1123, 1.442695
        %v1131 = vpow.pop %v1130
        %v1132 = vmul.f32 %v1124, 1.442695
        %v1133 = vpow.pop %v1132
        %v1134 = vmul.f32 %v1125, 1.442695
        %v1135 = vpow.pop %v1134
        %v1136 = vmul.f32 %v1126, 1.442695
        %v1137 = vpow.pop %v1136
        %v1138 = vmul.f32 %v1127, 1.442695
        %v1139 = vpow.pop %v1138
        %v1140 = vadd.f32 %v1129, 1.0
        %v1141 = vadd.f32 %v1131, 1.0
        %v1142 = vadd.f32 %v1133, 1.0
        %v1143 = vadd.f32 %v1135, 1.0
        %v1144 = vadd.f32 %v1137, 1.0
        %v1145 = vadd.f32 %v1139, 1.0
        %v1146 = vrcp.pop %v1140
        %v1147 = vmul.f32 1.0, %v1146
        %v1148 = vrcp.pop %v1141
        %v1149 = vmul.f32 1.0, %v1148
        %v1150 = vrcp.pop %v1142
        %v1151 = vmul.f32 1.0, %v1150
        %v1152 = vrcp.pop %v1143
        %v1153 = vmul.f32 1.0, %v1152
        %v1154 = vrcp.pop %v1144
        %v1155 = vmul.f32 1.0, %v1154
        %v1156 = vrcp.pop %v1145
        %v1157 = vmul.f32 1.0, %v1156
        %v1158 = vmul.f32 %v1116, %v1147
        %v1159 = vmul.f32 %v1117, %v1149
        %v1160 = vmul.f32 %v1118, %v1151
        %v1161 = vmul.f32 %v1119, %v1153
        %v1162 = vmul.f32 %v1120, %v1155
        %v1163 = vmul.f32 %v1121, %v1157
        %v1164 = vadd.f32 %v1158, %v1159
        %1165 = vadd.xlane.f32.xlu0 %v1164
        %v1166 = vpop.xlane.xlu0 %1165
        %v1167 = vadd.f32 %v1160, %v1161
        %1168 = vadd.xlane.f32.xlu0 %v1167
        %v1169 = vpop.xlane.xlu0 %1168
        %v1170 = vadd.f32 %v1162, %v1163
        %1171 = vadd.xlane.f32.xlu0 %v1170
        %v1172 = vpop.xlane.xlu0 %1171
        %v1173 = vmul.f32 %v1166, 0.00390625
        %v1174 = vmul.f32 %v1169, 0.00390625
        %v1175 = vmul.f32 %v1172, 0.00390625
        %v1176 = vmul.f32 %v1173, %v169
        %v1177 = vmul.f32 %v1174, %v170
        %v1178 = vmul.f32 %v1175, %v171
        %vm1179 = vcmask 138368
        %v1180 = vsel %vm1179, %v1176, 0.0
        %v1181 = vsel %vm1179, %v1177, 0.0
        %v1182 = vadd.f32 %v1180, %v1181
        %v1183 = vsel %vm1179, %v1178, 0.0
        %v1184 = vadd.f32 %v1182, %v1183
        %v1185 = vrot.slane %v1184, 4
        %v1186 = vadd.f32 %v1184, %v1185
        %v1187 = vrot.slane %v1186, 2
        %v1188 = vadd.f32 %v1186, %v1187
        %v1189 = vrot.slane %v1188, 1
        %v1190 = vadd.f32 %v1188, %v1189
        %v1191 = vadd.f32 %v1190, %v172
        %v1192 = vxor.u32 %v1191, 2147483648
        %v1193 = vmul.f32 %v1192, 1.442695
        %v1194 = vpow.pop %v1193
        %v1195 = vadd.f32 %v1194, 1.0
        %v1196 = vrcp.pop %v1195
        %v1197 = vmul.f32 1.0, %v1196
        %v1198 = vmul.f32 %v1191, %v1197
        %v1199 = vlaneseq
        %v1200 = vshrl.u32 %v1199, 7
        %v1201 = vsub.s32 0, %v1200
        %v1202 = vrot.slane %v1198, %v1201
        %1204 = vrot.lane.b32.xlu0 %v1202, 1
        %v1205 = vpop.permute.xlu0 %1204
        %v1207 = vmul.f32 %v169, %v1205
        %v1208 = vmul.f32 %v170, %v1205
        %v1209 = vmul.f32 %v171, %v1205
        %v1210 = vadd.f32 %v1207, 0.0
        %v1211 = vadd.f32 %v1208, 0.0
        %v1212 = vadd.f32 %v1209, 0.0
        %1213 = vrot.lane.b32.xlu0 %v169, 2
        %v1214 = vpop.permute.xlu0 %1213
        %1215 = vrot.lane.b32.xlu0 %v170, 2
        %v1216 = vpop.permute.xlu0 %1215
        %1217 = vrot.lane.b32.xlu0 %v171, 2
        %v1218 = vpop.permute.xlu0 %1217
        %v1222 = vadd.f32 %v1210, %v1214
        %v1223 = vadd.f32 %v1211, %v1216
        %v1224 = vadd.f32 %v1212, %v1218
        %v1225 = vxor.u32 %v1222, 2147483648
        %v1226 = vxor.u32 %v1223, 2147483648
        %v1227 = vxor.u32 %v1224, 2147483648
        %v1228 = vmul.f32 %v1225, 1.442695
        %v1229 = vpow.pop %v1228
        %v1230 = vmul.f32 %v1226, 1.442695
        %v1231 = vpow.pop %v1230
        %v1232 = vmul.f32 %v1227, 1.442695
        %v1233 = vpow.pop %v1232
        %v1234 = vadd.f32 %v1229, 1.0
        %v1235 = vadd.f32 %v1231, 1.0
        %v1236 = vadd.f32 %v1233, 1.0
        %v1237 = vrcp.pop %v1234
        %v1238 = vmul.f32 1.0, %v1237
        %v1239 = vrcp.pop %v1235
        %v1240 = vmul.f32 1.0, %v1239
        %v1241 = vrcp.pop %v1236
        %v1242 = vmul.f32 1.0, %v1241
        %1244 = vset.pattern.permute.xlu0 17
        %1245 = vperm.xlu0 %1244, %v1238
        %v1246 = vpop.permute.xlu0 %1245
        %1249 = vset.pattern.permute.xlu0 17
        %1250 = vperm.xlu0 %1249, %v1240
        %v1251 = vpop.permute.xlu0 %1250
        %1254 = vset.pattern.permute.xlu0 17
        %1255 = vperm.xlu0 %1254, %v1242
        %v1256 = vpop.permute.xlu0 %1255
        %v1258 = vmul.f32 %v1158, %v1246
        %v1259 = vmul.f32 %v1159, %v1246
        %v1260 = vmul.f32 %v1160, %v1251
        %v1261 = vmul.f32 %v1161, %v1251
        %v1262 = vmul.f32 %v1162, %v1256
        %v1263 = vmul.f32 %v1163, %v1256
        %vm1264 = vcmask 195584
        %v1266 = vsel %vm1264, %v176, 0
        %1268 = vmatprep.subr.mxu0 0.0
        %1269 = vmatpush1.msra.mxu0 0.0
        %1270 = vmatprep.subr.mxu0 0.0
        %1271 = vmatpush1.msra.mxu0 0.0
        %1272 = vmatprep.subr.mxu0 0.0
        %1273 = vmatpush1.msra.mxu0 0.0
        %1274 = vmatprep.subr.mxu0 0.0
        %1275 = vmatpush1.msra.mxu0 0.0
        %1276 = vmatprep.subr.mxu0 0.0
        %1277 = vmatpush1.msra.mxu0 0.0
        %1278 = vmatprep.subr.mxu0 0.0
        %1279 = vmatpush1.msra.mxu0 0.0
        %1280 = vmatprep.subr.mxu0 0.0
        %1281 = vmatpush1.msra.mxu0 0.0
        %1282 = vmatprep.subr.mxu0 0.0
        %1283 = vmatpush1.msra.mxu0 0.0
        %1284 = vmatprep.subr.mxu0 0.0
        %1285 = vmatpush1.msra.mxu0 0.0
        %1286 = vmatprep.subr.mxu0 0.0
        %1287 = vmatpush1.msra.mxu0 0.0
        %1288 = vmatprep.subr.mxu0 0.0
        %1289 = vmatpush1.msra.mxu0 0.0
        %1290 = vmatprep.subr.mxu0 0.0
        %1291 = vmatpush1.msra.mxu0 0.0
        %1292 = vmatprep.subr.mxu0 0.0
        %1293 = vmatpush1.msra.mxu0 0.0
        %1294 = vmatprep.subr.mxu0 %v1263
        %1295 = vmatpush1.msra.mxu0 %v1262
        %1296 = vmatprep.subr.mxu0 %v1261
        %1297 = vmatpush1.msra.mxu0 %v1260
        %1298 = vmatprep.subr.mxu0 %v1259
        %1299 = vmatpush1.msra.mxu0 %v1258
        %1300 = vmatprep.subr.mxu0 0.0
        %1301 = vmatpush2.msra.mxu0 0.0
        %1302 = vmatprep.subr.mxu0 0.0
        %1303 = vmatpush2.msra.mxu0 0.0
        %1304 = vmatprep.subr.mxu0 0.0
        %1305 = vmatpush2.msra.mxu0 0.0
        %1306 = vmatprep.subr.mxu0 0.0
        %1307 = vmatpush2.msra.mxu0 0.0
        %1308 = vmatprep.subr.mxu0 0.0
        %1309 = vmatpush2.msra.mxu0 0.0
        %1310 = vmatprep.subr.mxu0 0.0
        %1311 = vmatpush2.msra.mxu0 0.0
        %1312 = vmatprep.subr.mxu0 0.0
        %1313 = vmatpush2.msra.mxu0 0.0
        %1314 = vmatprep.subr.mxu0 0.0
        %1315 = vmatpush2.msra.mxu0 0.0
        %1316 = vmatprep.subr.mxu0 0.0
        %1317 = vmatpush2.msra.mxu0 0.0
        %1318 = vmatprep.subr.mxu0 0.0
        %1319 = vmatpush2.msra.mxu0 0.0
        %1320 = vmatprep.subr.mxu0 0.0
        %1321 = vmatpush2.msra.mxu0 0.0
        %1322 = vmatprep.subr.mxu0 0.0
        %1323 = vmatpush2.msra.mxu0 0.0
        %1324 = vmatprep.subr.mxu0 0.0
        %1325 = vmatpush2.msra.mxu0 0.0
        %1326 = vmatprep.subr.mxu0 0.0
        %1327 = vmatpush2.msra.mxu0 0.0
        %1328 = vmatprep.subr.mxu0 0.0
        %1329 = vmatpush2.msra.mxu0 0.0
        %1330 = vmatprep.subr.mxu0 0.0
        %1331 = vmatpush2.msra.mxu0 0.0
        %1332 = vmatprep.mubr.f32.mxu0 0.0
        %1333 = vmatmul.mubr.f32.gmra.mxu0 %v1266
        %v1334 = vpop.f32.mrf.mxu0
        %v1335 = vadd.f32 0.0, %v1334
        %v1336 = vpop.f32.mrf.mxu0
        %v1337 = vadd.f32 0.0, %v1336
        %1338 = vdwg.mxu0
        %1339 = vset.pattern.permute.xlu0 13
        %1340 = vperm.xlu0 %1339, %v169
        %v1341 = vpop.permute.xlu0 %1340
        %v1343 = vmul.f32 %v1335, %v1341
        %v1344 = vmul.f32 %v1337, %v1341
        %1345 = vset.pattern.permute.xlu0 14
        %1346 = vperm.xlu0 %1345, %v169
        %v1347 = vpop.permute.xlu0 %1346
        %v1349 = vadd.f32 %v1343, %v1347
        %v1350 = vadd.f32 %v1344, %v1347
        %v1352 = vadd.f32 %v1349, %v177
        %v1353 = vadd.f32 %v1350, %v179
        %v1356 = vcombine.low %v1352, %v1353
        %1358 = vst [vmem:[%s163] sm:$0xff] %v1356
        %s1359 = sand.u32 %s93, 1
        %s1360 = scalar_lea.sflag [#allocation3], %s1359
        %s1361 = sand.u32 %s93, 1
        %s1362 = smul.addr %s1361, 8
        %s1363 = scalar_lea.vmem [#allocation2], %s1362
        // Predicated region
        $region33: #{tpu_custom_call.1} parent=31 // pred_check
          %p1364 = pneg %p103
        $region34: #{tpu_custom_call.1} parent=31 // pred_check_branch
          %1366 = sbr.rel (%p1364) target = $region36
        $region35: #{tpu_custom_call.1} parent=31 // pred_region
          %s1368 = ssub.s32 128, 128
          %1369 = vsyncadd %s1360, %s1368
          %s1370 = smul.addr %s17, 2
          %s1371 = smul.addr %s1370, 64
          %s1372 = scalar_lea.hbm %s3, %s1371
          %s1374 = sshll.u32 %s1363, 4
          %s1375 = int_to_ptr.vmem [resolvable:$true] %s1374
          %1377 = dma.vmem_to_hbm [thread:$0]  %s1375, 128, %s1372, %s1360
        $region36: #{tpu_custom_call.1} parent=31 // pred_fallthru
          _
      $region32: #{tpu_custom_call.1} parent=5 // pred_fallthru
        _
      %p1378 = scmp.le.s32.totalorder 2, %s12
      // Predicated region
      $region37: #{tpu_custom_call.1} parent=5 // pred_check
        %p1379 = pneg %p1378
      $region38: #{tpu_custom_call.1} parent=5 // pred_check_branch
        %1381 = sbr.rel (%p1379) target = $region40
      $region39: #{tpu_custom_call.1} parent=5 // pred_region
        %s1382 = ssub.s32 %s12, 2
        // Predicated region
        $region41: #{tpu_custom_call.1} parent=39 // pred_check
          %p1383 = pneg %p109
        $region42: #{tpu_custom_call.1} parent=39 // pred_check_branch
          %1385 = sbr.rel (%p1383) target = $region44
        $region43: #{tpu_custom_call.1} parent=39 // pred_region
          %s1386 = sand.u32 %s94, 1
          %s1387 = scalar_lea.sflag [#allocation3], %s1386
          %s1388 = sand.u32 %s94, 1
          %s1389 = smul.addr %s1388, 8
          %s1390 = scalar_lea.vmem [#allocation2], %s1389
          %1391 = dma.done %s1387, 128
        $region44: #{tpu_custom_call.1} parent=39 // pred_fallthru
          _
      $region40: #{tpu_custom_call.1} parent=5 // pred_fallthru
        _
    $region6: #{tpu_custom_call.1} parent=1 // loop_footer
      %s16 = sadd.s32 1, %s12
    $region7: #{tpu_custom_call.1} parent=1 // loop_footer_branch
      %11 = sbr.rel target = $region3
    $region8: #{tpu_custom_call.1} parent=1 // loop_exit
      _
    %1392 = vsyncpa [#allocation3], 1
    %s1393 = scalar_lea.sflag [#allocation3], 1
    %1394 = vsyncpa %s1393, 1

</llo_original>
